<compile_context>
chip_gen: v6e
topology: v6e:2x2x1
jax: 0.10.0
libtpu: 0.0.40
codegen_flags: <defaults>
</compile_context>

<pallas_src>
import jax
import jax.numpy as jnp
from jax.experimental import pallas as pl
from jax.experimental.pallas import tpu as pltpu


def simple_net_kernel(x_ref,
                      w1_ref, w2_ref, w3_ref, w4_ref,
                      b_ref,
                      o_ref):
    """x_ref: (TILE_B, in) bf16; w*: (fan_in, fan_out) bf16; b_ref: (4, BW) f32."""
    n1 = w1_ref.shape[1]
    n2 = w2_ref.shape[1]
    n3 = w3_ref.shape[1]
    n4 = w4_ref.shape[1]

    # fc1 + relu (bf16 operands on the MXU, f32 accumulate / bias / ReLU)
    h = jnp.dot(x_ref[...], w1_ref[...], preferred_element_type=jnp.float32)
    h = jnp.maximum(h + b_ref[0:1, 0:n1], 0.0)
    # fc2 + relu
    h = jnp.dot(h.astype(w2_ref.dtype), w2_ref[...],
                preferred_element_type=jnp.float32)
    h = jnp.maximum(h + b_ref[1:2, 0:n2], 0.0)
    # fc3 + relu
    h = jnp.dot(h.astype(w3_ref.dtype), w3_ref[...],
                preferred_element_type=jnp.float32)
    h = jnp.maximum(h + b_ref[2:3, 0:n3], 0.0)
    # fc4 + relu (PyTorch reference applies ReLU on the output layer too)
    h = jnp.dot(h.astype(w4_ref.dtype), w4_ref[...],
                preferred_element_type=jnp.float32)
    h = jnp.maximum(h + b_ref[3:4, 0:n4], 0.0)

    o_ref[...] = h.astype(o_ref.dtype)


def _round_up(x, m):
    return (x + m - 1) // m * m


def simple_net_forward(x, params, *, tile_b=512):
    """x: (B, in_feature) f32; params: w1..w4 (fan_in, fan_out), b1..b4 (1, fan_out)."""
    B, in_feature = x.shape
    hidden = params["w1"].shape[1]
    out_feature = params["w4"].shape[1]

    # bf16 weights/activations (f32 accumulate happens inside the kernel).
    xb = x.astype(jnp.bfloat16)
    w1 = params["w1"].astype(jnp.bfloat16)
    w2 = params["w2"].astype(jnp.bfloat16)
    w3 = params["w3"].astype(jnp.bfloat16)
    w4 = params["w4"].astype(jnp.bfloat16)

    # Pack the four biases into a single (4, BW) f32 array (one DMA, not four).
    bw = max(hidden, out_feature)
    bias_pack = jnp.concatenate(
        [jnp.pad(params[f"b{i}"].reshape(1, -1),
                 ((0, 0), (0, bw - params[f"b{i}"].shape[-1])))
         for i in range(1, 5)],
        axis=0,
    ).astype(jnp.float32)

    # Batch tiling: large tiles stream through a 1-D grid.
    tile_b = max(8, _round_up(int(tile_b), 8))
    tile_b = min(tile_b, _round_up(B, 8))
    b_pad = _round_up(B, tile_b)
    if b_pad != B:
        xb = jnp.pad(xb, ((0, b_pad - B), (0, 0)))
    grid = (b_pad // tile_b,)

    out = pl.pallas_call(
        simple_net_kernel,
        out_shape=jax.ShapeDtypeStruct((b_pad, out_feature), jnp.float32),
        grid_spec=pltpu.PrefetchScalarGridSpec(
            num_scalar_prefetch=0,
            grid=grid,
            in_specs=[
                # x tiles stream; everything else is loaded once and stays resident.
                pl.BlockSpec((tile_b, in_feature), lambda i: (i, 0)),
                pl.BlockSpec(w1.shape, lambda i: (0, 0)),
                pl.BlockSpec(w2.shape, lambda i: (0, 0)),
                pl.BlockSpec(w3.shape, lambda i: (0, 0)),
                pl.BlockSpec(w4.shape, lambda i: (0, 0)),
                pl.BlockSpec(bias_pack.shape, lambda i: (0, 0)),
            ],
            out_specs=pl.BlockSpec((tile_b, out_feature), lambda i: (i, 0)),
        ),
        compiler_params=pltpu.CompilerParams(
            dimension_semantics=("parallel",),
        ),
    )(xb, w1, w2, w3, w4, bias_pack)
    return out[:B]


def init_params(key, in_feature, out_feature):
    """PyTorch nn.Linear default init: U(-1/sqrt(fan_in), 1/sqrt(fan_in))."""
    dims = [(in_feature, 64), (64, 64), (64, 64), (64, out_feature)]
    params = {}
    for i, (fi, fo) in enumerate(dims, start=1):
        key, kw, kb = jax.random.split(key, 3)
        bound = 1.0 / jnp.sqrt(jnp.float32(fi))
        params[f"w{i}"] = jax.random.uniform(kw, (fi, fo), jnp.float32, -bound, bound)
        params[f"b{i}"] = jax.random.uniform(kb, (1, fo), jnp.float32, -bound, bound)
    return params


if __name__ == "__main__":
    B, IN_FEATURE, OUT_FEATURE = 64, 32, 16

    key = jax.random.PRNGKey(0)
    key, kx = jax.random.split(key)
    x = jax.random.normal(kx, (B, IN_FEATURE), jnp.float32)
    params = init_params(key, IN_FEATURE, OUT_FEATURE)

    # Small tile so the demo exercises a multi-step grid (grid=(2,)).
    out = simple_net_forward(x, params, tile_b=32)
    jax.block_until_ready(out)

    # Reference in plain JAX with the same math (bf16 operands, f32 accumulate,
    # f32 bias-add + ReLU).
    h = x.astype(jnp.float32)
    for i in range(1, 5):
        w = params[f"w{i}"].astype(jnp.bfloat16)
        acc = jnp.dot(h.astype(jnp.bfloat16), w,
                      preferred_element_type=jnp.float32)
        h = jnp.maximum(acc + params[f"b{i}"], 0.0)
    ref = h

    assert out.shape == (B, OUT_FEATURE)
    assert jnp.allclose(out, ref, atol=2e-3, rtol=2e-3), \
        float(jnp.max(jnp.abs(out - ref)))

    print("KERNEL_OK")
</pallas_src>

<mosaic_0001>
module attributes {stable_mosaic.version = 11 : i64} {
  func.func @simple_net_kernel(%arg0: i32, %arg1: memref<32x32xbf16, #tpu.memory_space<vmem>>, %arg2: memref<32x64xbf16, #tpu.memory_space<vmem>>, %arg3: memref<64x64xbf16, #tpu.memory_space<vmem>>, %arg4: memref<64x64xbf16, #tpu.memory_space<vmem>>, %arg5: memref<64x16xbf16, #tpu.memory_space<vmem>>, %arg6: memref<4x64xf32, #tpu.memory_space<vmem>>, %arg7: memref<32x16xf32, #tpu.memory_space<vmem>>) attributes {dimension_semantics = [#tpu.dimension_semantics<parallel>], iteration_bounds = array<i64: 2>, scalar_prefetch = 0 : i64, scratch_operands = 0 : i64, tpu.core_type = #tpu.core_type<tc>, window_params = [{transform_indices = @transform_0, window_bounds = array<i64: 32, 32>}, {pipeline_mode = #tpu.pipeline_mode<synchronous>, transform_indices = @transform_1, window_bounds = array<i64: 32, 64>}, {pipeline_mode = #tpu.pipeline_mode<synchronous>, transform_indices = @transform_2, window_bounds = array<i64: 64, 64>}, {pipeline_mode = #tpu.pipeline_mode<synchronous>, transform_indices = @transform_3, window_bounds = array<i64: 64, 64>}, {pipeline_mode = #tpu.pipeline_mode<synchronous>, transform_indices = @transform_4, window_bounds = array<i64: 64, 16>}, {pipeline_mode = #tpu.pipeline_mode<synchronous>, transform_indices = @transform_5, window_bounds = array<i64: 4, 64>}, {transform_indices = @transform_6, window_bounds = array<i64: 32, 16>}]} {
    %c0 = arith.constant 0 : index
    %c0_0 = arith.constant 0 : index
    %0 = vector.load %arg1[%c0, %c0_0] : memref<32x32xbf16, #tpu.memory_space<vmem>>, vector<32x32xbf16>
    %c0_1 = arith.constant 0 : index
    %c0_2 = arith.constant 0 : index
    %1 = vector.load %arg2[%c0_1, %c0_2] : memref<32x64xbf16, #tpu.memory_space<vmem>>, vector<32x64xbf16>
    %cst = arith.constant dense<0.000000e+00> : vector<32x64xf32>
    %2 = tpu.matmul %0, %1, %cst {dimension_numbers = #tpu.dot_dimension_numbers<[1], [0], [0], [1], [0, 0, 1, 1], [], []>} : vector<32x32xbf16>, vector<32x64xbf16>, vector<32x64xf32> -> vector<32x64xf32>
    %c0_3 = arith.constant 0 : index
    %c0_4 = arith.constant 0 : index
    %3 = vector.load %arg6[%c0_3, %c0_4] : memref<4x64xf32, #tpu.memory_space<vmem>>, vector<1x64xf32>
    %4 = vector.broadcast %3 : vector<1x64xf32> to vector<32x64xf32>
    %5 = arith.addf %2, %4 : vector<32x64xf32>
    %cst_5 = arith.constant 0.000000e+00 : f32
    %6 = vector.broadcast %cst_5 : f32 to vector<32x64xf32>
    %7 = arith.maximumf %5, %6 : vector<32x64xf32>
    %8 = arith.truncf %7 : vector<32x64xf32> to vector<32x64xbf16>
    %c0_6 = arith.constant 0 : index
    %c0_7 = arith.constant 0 : index
    %9 = vector.load %arg3[%c0_6, %c0_7] : memref<64x64xbf16, #tpu.memory_space<vmem>>, vector<64x64xbf16>
    %cst_8 = arith.constant dense<0.000000e+00> : vector<32x64xf32>
    %10 = tpu.matmul %8, %9, %cst_8 {dimension_numbers = #tpu.dot_dimension_numbers<[1], [0], [0], [1], [0, 0, 1, 1], [], []>} : vector<32x64xbf16>, vector<64x64xbf16>, vector<32x64xf32> -> vector<32x64xf32>
    %c1 = arith.constant 1 : index
    %c0_9 = arith.constant 0 : index
    %11 = vector.load %arg6[%c1, %c0_9] : memref<4x64xf32, #tpu.memory_space<vmem>>, vector<1x64xf32>
    %12 = vector.broadcast %11 : vector<1x64xf32> to vector<32x64xf32>
    %13 = arith.addf %10, %12 : vector<32x64xf32>
    %cst_10 = arith.constant 0.000000e+00 : f32
    %14 = vector.broadcast %cst_10 : f32 to vector<32x64xf32>
    %15 = arith.maximumf %13, %14 : vector<32x64xf32>
    %16 = arith.truncf %15 : vector<32x64xf32> to vector<32x64xbf16>
    %c0_11 = arith.constant 0 : index
    %c0_12 = arith.constant 0 : index
    %17 = vector.load %arg4[%c0_11, %c0_12] : memref<64x64xbf16, #tpu.memory_space<vmem>>, vector<64x64xbf16>
    %cst_13 = arith.constant dense<0.000000e+00> : vector<32x64xf32>
    %18 = tpu.matmul %16, %17, %cst_13 {dimension_numbers = #tpu.dot_dimension_numbers<[1], [0], [0], [1], [0, 0, 1, 1], [], []>} : vector<32x64xbf16>, vector<64x64xbf16>, vector<32x64xf32> -> vector<32x64xf32>
    %c2 = arith.constant 2 : index
    %c0_14 = arith.constant 0 : index
    %19 = vector.load %arg6[%c2, %c0_14] : memref<4x64xf32, #tpu.memory_space<vmem>>, vector<1x64xf32>
    %20 = vector.broadcast %19 : vector<1x64xf32> to vector<32x64xf32>
    %21 = arith.addf %18, %20 : vector<32x64xf32>
    %cst_15 = arith.constant 0.000000e+00 : f32
    %22 = vector.broadcast %cst_15 : f32 to vector<32x64xf32>
    %23 = arith.maximumf %21, %22 : vector<32x64xf32>
    %24 = arith.truncf %23 : vector<32x64xf32> to vector<32x64xbf16>
    %c0_16 = arith.constant 0 : index
    %c0_17 = arith.constant 0 : index
    %25 = vector.load %arg5[%c0_16, %c0_17] : memref<64x16xbf16, #tpu.memory_space<vmem>>, vector<64x16xbf16>
    %cst_18 = arith.constant dense<0.000000e+00> : vector<32x16xf32>
    %26 = tpu.matmul %24, %25, %cst_18 {dimension_numbers = #tpu.dot_dimension_numbers<[1], [0], [0], [1], [0, 0, 1, 1], [], []>} : vector<32x64xbf16>, vector<64x16xbf16>, vector<32x16xf32> -> vector<32x16xf32>
    %c3 = arith.constant 3 : index
    %c0_19 = arith.constant 0 : index
    %27 = vector.load %arg6[%c3, %c0_19] : memref<4x64xf32, #tpu.memory_space<vmem>>, vector<1x16xf32>
    %28 = vector.broadcast %27 : vector<1x16xf32> to vector<32x16xf32>
    %29 = arith.addf %26, %28 : vector<32x16xf32>
    %cst_20 = arith.constant 0.000000e+00 : f32
    %30 = vector.broadcast %cst_20 : f32 to vector<32x16xf32>
    %31 = arith.maximumf %29, %30 : vector<32x16xf32>
    %c0_21 = arith.constant 0 : index
    %c0_22 = arith.constant 0 : index
    %32 = vector.load %arg7[%c0_21, %c0_22] : memref<32x16xf32, #tpu.memory_space<vmem>>, vector<32x16xf32>
    tpu.vector_store %arg7[%c0_21, %c0_22], %31 {strides = array<i32>} : memref<32x16xf32, #tpu.memory_space<vmem>>, vector<32x16xf32>,
    return
  }
  func.func @transform_0(%arg0: i32) -> (i32, i32) {
    %c0_i32 = arith.constant 0 : i32
    %c0_i32_0 = arith.constant 0 : i32
    return %arg0, %c0_i32 : i32, i32
  }
  func.func @transform_1(%arg0: i32) -> (i32, i32) {
    %c0_i32 = arith.constant 0 : i32
    %c0_i32_0 = arith.constant 0 : i32
    %c0_i32_1 = arith.constant 0 : i32
    return %c0_i32, %c0_i32_0 : i32, i32
  }
  func.func @transform_2(%arg0: i32) -> (i32, i32) {
    %c0_i32 = arith.constant 0 : i32
    %c0_i32_0 = arith.constant 0 : i32
    %c0_i32_1 = arith.constant 0 : i32
    return %c0_i32, %c0_i32_0 : i32, i32
  }
  func.func @transform_3(%arg0: i32) -> (i32, i32) {
    %c0_i32 = arith.constant 0 : i32
    %c0_i32_0 = arith.constant 0 : i32
    %c0_i32_1 = arith.constant 0 : i32
    return %c0_i32, %c0_i32_0 : i32, i32
  }
  func.func @transform_4(%arg0: i32) -> (i32, i32) {
    %c0_i32 = arith.constant 0 : i32
    %c0_i32_0 = arith.constant 0 : i32
    %c0_i32_1 = arith.constant 0 : i32
    return %c0_i32, %c0_i32_0 : i32, i32
  }
  func.func @transform_5(%arg0: i32) -> (i32, i32) {
    %c0_i32 = arith.constant 0 : i32
    %c0_i32_0 = arith.constant 0 : i32
    %c0_i32_1 = arith.constant 0 : i32
    return %c0_i32, %c0_i32_0 : i32, i32
  }
  func.func @transform_6(%arg0: i32) -> (i32, i32) {
    %c0_i32 = arith.constant 0 : i32
    %c0_i32_0 = arith.constant 0 : i32
    return %arg0, %c0_i32 : i32, i32
  }
}

</mosaic_0001>

<llo_original>
// kernel: tpu_custom_call.1
$region0: #{tpu_custom_call.1}
  #allocation0 [shape = 'u32[]', space=smem, size = 0x4, offset = 0x4, fixed_abs, tag = 'smem constant byte address 0x4 - core index']
  #allocation1 [shape = 'u32[144,128]{1,0:T(1,128)}', space=vmem, size = 0x12000, scoped, tag = 'internal scratch']
  %s0 = inlined_call_operand.vmem [shape: bf16[64,32], index: 0, kind: input, shape index: {}]
  %s1 = inlined_call_operand.vmem [shape: bf16[32,64], index: 1, kind: input, shape index: {}]
  %s2 = inlined_call_operand.vmem [shape: bf16[64,64], index: 2, kind: input, shape index: {}]
  %s3 = inlined_call_operand.vmem [shape: bf16[64,64], index: 3, kind: input, shape index: {}]
  %s4 = inlined_call_operand.vmem [shape: bf16[64,16], index: 4, kind: input, shape index: {}]
  %s5 = inlined_call_operand.vmem [shape: f32[4,64], index: 5, kind: input, shape index: {}]
  %s6 = inlined_call_operand.vmem [shape: f32[64,16], index: 6, kind: output, shape index: {}]
  %s7 = sld [smem:[#allocation0]]
  $region57: #{tpu_custom_call.1} parent=0
    _
  %s9 = ssub.s32 1, %s7
  %s10 = scalar_select 0, %s9, %s7
  loop: start=0, step=1, limit=4
  $region2: #{tpu_custom_call.1} parent=0 // loop_pre_header
    _
  $region3: #{tpu_custom_call.1} parent=0 // loop_header
    %s12 = sphi 0, %s16
    %p13 = scmp.ge.s32.totalorder %s12, 4
    %s22 = sphi 0, %s24
    %s25 = sphi 0, %s22
    %s26 = sphi 0, %s25
    %s42 = sphi 0, %s26
    %s46 = sphi 0, %s46
    %s48 = sphi 0, %s46
    %s49 = sphi 0, %s48
    %s63 = sphi 0, %s49
    %s67 = sphi 0, %s67
    %s69 = sphi 0, %s67
    %s70 = sphi 0, %s69
    %s84 = sphi 0, %s70
    %s88 = sphi 0, %s88
    %s90 = sphi 0, %s88
    %s91 = sphi 0, %s90
    %s105 = sphi 0, %s91
    %s109 = sphi 0, %s109
    %s111 = sphi 0, %s109
    %s112 = sphi 0, %s111
    %s126 = sphi 0, %s112
    %s130 = sphi 0, %s130
    %s132 = sphi 0, %s130
    %s133 = sphi 0, %s132
    %s147 = sphi 0, %s133
    %s153 = sphi 0, %s155
    %s156 = sphi 0, %s153
    %s157 = sphi 0, %s156
    %s173 = sphi 0, %s157
  $region4: #{tpu_custom_call.1} parent=0 // loop_header_branch
    %15 = sbr.rel (%p13) target = $region8
  $region5: #{tpu_custom_call.1} parent=0 // loop_body
    %s17 = ssub.s32 %s12, 1
    %s18 = ssub.s32 %s12, 2
    %s19 = sadd.s32 %s12, 1
    %s20 = ssub.s32 %s12, %s19
    %p21 = scmp.eq.s32.totalorder %s20, 0
    %s23 = sadd.s32 %s22, 1
    %s24 = scalar_select %p21, %s22, %s23
    %p27 = pneg %p21
    %p28 = scmp.eq.s32.totalorder %s12, 1
    %p29 = por %p27, %p28
    %p30 = scmp.ne.s32.totalorder %s22, %s25
    %p31 = scmp.eq.s32.totalorder %s12, 0
    %p32 = por %p30, %p31
    %p33 = scmp.ne.s32.totalorder %s22, %s25
    %p34 = scmp.eq.s32.totalorder %s17, 1
    %p35 = por %p33, %p34
    %p36 = scmp.ne.s32.totalorder %s25, %s26
    %p37 = scmp.eq.s32.totalorder %s17, 0
    %p38 = por %p36, %p37
    %p39 = scmp.ne.s32.totalorder %s25, %s26
    %p40 = scmp.eq.s32.totalorder %s18, 1
    %p41 = por %p39, %p40
    %p43 = scmp.ne.s32.totalorder %s26, %s42
    %p44 = scmp.eq.s32.totalorder %s18, 0
    %p45 = por %p43, %p44
    %s47 = sadd.s32 %s46, 1
    %p50 = scmp.eq.s32.totalorder %s12, 1
    %p51 = scmp.ne.s32.totalorder %s46, %s48
    %p52 = scmp.eq.s32.totalorder %s12, 0
    %p53 = por %p51, %p52
    %p54 = scmp.ne.s32.totalorder %s46, %s48
    %p55 = scmp.eq.s32.totalorder %s17, 1
    %p56 = por %p54, %p55
    %p57 = scmp.ne.s32.totalorder %s48, %s49
    %p58 = scmp.eq.s32.totalorder %s17, 0
    %p59 = por %p57, %p58
    %p60 = scmp.ne.s32.totalorder %s48, %s49
    %p61 = scmp.eq.s32.totalorder %s18, 1
    %p62 = por %p60, %p61
    %p64 = scmp.ne.s32.totalorder %s49, %s63
    %p65 = scmp.eq.s32.totalorder %s18, 0
    %p66 = por %p64, %p65
    %s68 = sadd.s32 %s67, 1
    %p71 = scmp.eq.s32.totalorder %s12, 1
    %p72 = scmp.ne.s32.totalorder %s67, %s69
    %p73 = scmp.eq.s32.totalorder %s12, 0
    %p74 = por %p72, %p73
    %p75 = scmp.ne.s32.totalorder %s67, %s69
    %p76 = scmp.eq.s32.totalorder %s17, 1
    %p77 = por %p75, %p76
    %p78 = scmp.ne.s32.totalorder %s69, %s70
    %p79 = scmp.eq.s32.totalorder %s17, 0
    %p80 = por %p78, %p79
    %p81 = scmp.ne.s32.totalorder %s69, %s70
    %p82 = scmp.eq.s32.totalorder %s18, 1
    %p83 = por %p81, %p82
    %p85 = scmp.ne.s32.totalorder %s70, %s84
    %p86 = scmp.eq.s32.totalorder %s18, 0
    %p87 = por %p85, %p86
    %s89 = sadd.s32 %s88, 1
    %p92 = scmp.eq.s32.totalorder %s12, 1
    %p93 = scmp.ne.s32.totalorder %s88, %s90
    %p94 = scmp.eq.s32.totalorder %s12, 0
    %p95 = por %p93, %p94
    %p96 = scmp.ne.s32.totalorder %s88, %s90
    %p97 = scmp.eq.s32.totalorder %s17, 1
    %p98 = por %p96, %p97
    %p99 = scmp.ne.s32.totalorder %s90, %s91
    %p100 = scmp.eq.s32.totalorder %s17, 0
    %p101 = por %p99, %p100
    %p102 = scmp.ne.s32.totalorder %s90, %s91
    %p103 = scmp.eq.s32.totalorder %s18, 1
    %p104 = por %p102, %p103
    %p106 = scmp.ne.s32.totalorder %s91, %s105
    %p107 = scmp.eq.s32.totalorder %s18, 0
    %p108 = por %p106, %p107
    %s110 = sadd.s32 %s109, 1
    %p113 = scmp.eq.s32.totalorder %s12, 1
    %p114 = scmp.ne.s32.totalorder %s109, %s111
    %p115 = scmp.eq.s32.totalorder %s12, 0
    %p116 = por %p114, %p115
    %p117 = scmp.ne.s32.totalorder %s109, %s111
    %p118 = scmp.eq.s32.totalorder %s17, 1
    %p119 = por %p117, %p118
    %p120 = scmp.ne.s32.totalorder %s111, %s112
    %p121 = scmp.eq.s32.totalorder %s17, 0
    %p122 = por %p120, %p121
    %p123 = scmp.ne.s32.totalorder %s111, %s112
    %p124 = scmp.eq.s32.totalorder %s18, 1
    %p125 = por %p123, %p124
    %p127 = scmp.ne.s32.totalorder %s112, %s126
    %p128 = scmp.eq.s32.totalorder %s18, 0
    %p129 = por %p127, %p128
    %s131 = sadd.s32 %s130, 1
    %p134 = scmp.eq.s32.totalorder %s12, 1
    %p135 = scmp.ne.s32.totalorder %s130, %s132
    %p136 = scmp.eq.s32.totalorder %s12, 0
    %p137 = por %p135, %p136
    %p138 = scmp.ne.s32.totalorder %s130, %s132
    %p139 = scmp.eq.s32.totalorder %s17, 1
    %p140 = por %p138, %p139
    %p141 = scmp.ne.s32.totalorder %s132, %s133
    %p142 = scmp.eq.s32.totalorder %s17, 0
    %p143 = por %p141, %p142
    %p144 = scmp.ne.s32.totalorder %s132, %s133
    %p145 = scmp.eq.s32.totalorder %s18, 1
    %p146 = por %p144, %p145
    %p148 = scmp.ne.s32.totalorder %s133, %s147
    %p149 = scmp.eq.s32.totalorder %s18, 0
    %p150 = por %p148, %p149
    %s151 = ssub.s32 %s12, %s19
    %p152 = scmp.eq.s32.totalorder %s151, 0
    %s154 = sadd.s32 %s153, 1
    %s155 = scalar_select %p152, %s153, %s154
    %p158 = pneg %p152
    %p159 = scmp.eq.s32.totalorder %s12, 1
    %p160 = por %p158, %p159
    %p161 = scmp.ne.s32.totalorder %s153, %s156
    %p162 = scmp.eq.s32.totalorder %s12, 0
    %p163 = por %p161, %p162
    %p164 = scmp.ne.s32.totalorder %s153, %s156
    %p165 = scmp.eq.s32.totalorder %s17, 1
    %p166 = por %p164, %p165
    %p167 = scmp.ne.s32.totalorder %s156, %s157
    %p168 = scmp.eq.s32.totalorder %s17, 0
    %p169 = por %p167, %p168
    %p170 = scmp.ne.s32.totalorder %s156, %s157
    %p171 = scmp.eq.s32.totalorder %s18, 1
    %p172 = por %p170, %p171
    %p174 = scmp.ne.s32.totalorder %s157, %s173
    %p175 = scmp.eq.s32.totalorder %s18, 0
    %p176 = por %p174, %p175
    %p177 = scmp.le.s32.totalorder 1, %s12
    %p178 = scmp.lt.s32.totalorder %s12, 3
    %p179 = pnand %p177, %p178
    %p180 = pneg %p179
    // Predicated region
    $region9: #{tpu_custom_call.1} parent=5 // pred_check
      _
    $region10: #{tpu_custom_call.1} parent=5 // pred_check_branch
      %182 = sbr.rel (%p179) target = $region12
    $region11: #{tpu_custom_call.1} parent=5 // pred_region
      %s183 = ssub.s32 %s12, 1
      // Predicated region
      $region13: #{tpu_custom_call.1} parent=11 // pred_check
        %p184 = pneg %p59
      $region14: #{tpu_custom_call.1} parent=11 // pred_check_branch
        %186 = sbr.rel (%p184) target = $region16
      $region15: #{tpu_custom_call.1} parent=11 // pred_region
        _
      $region16: #{tpu_custom_call.1} parent=11 // pred_fallthru
        _
      // Predicated region
      $region17: #{tpu_custom_call.1} parent=11 // pred_check
        %p187 = pneg %p80
      $region18: #{tpu_custom_call.1} parent=11 // pred_check_branch
        %189 = sbr.rel (%p187) target = $region20
      $region19: #{tpu_custom_call.1} parent=11 // pred_region
        _
      $region20: #{tpu_custom_call.1} parent=11 // pred_fallthru
        _
      // Predicated region
      $region21: #{tpu_custom_call.1} parent=11 // pred_check
        %p190 = pneg %p101
      $region22: #{tpu_custom_call.1} parent=11 // pred_check_branch
        %192 = sbr.rel (%p190) target = $region24
      $region23: #{tpu_custom_call.1} parent=11 // pred_region
        _
      $region24: #{tpu_custom_call.1} parent=11 // pred_fallthru
        _
      // Predicated region
      $region25: #{tpu_custom_call.1} parent=11 // pred_check
        %p193 = pneg %p122
      $region26: #{tpu_custom_call.1} parent=11 // pred_check_branch
        %195 = sbr.rel (%p193) target = $region28
      $region27: #{tpu_custom_call.1} parent=11 // pred_region
        _
      $region28: #{tpu_custom_call.1} parent=11 // pred_fallthru
        _
      // Predicated region
      $region29: #{tpu_custom_call.1} parent=11 // pred_check
        %p196 = pneg %p143
      $region30: #{tpu_custom_call.1} parent=11 // pred_check_branch
        %198 = sbr.rel (%p196) target = $region32
      $region31: #{tpu_custom_call.1} parent=11 // pred_region
        _
      $region32: #{tpu_custom_call.1} parent=11 // pred_fallthru
        _
    $region12: #{tpu_custom_call.1} parent=5 // pred_fallthru
      _
    %p199 = scmp.lt.s32.totalorder %s12, 2
    // Predicated region
    $region33: #{tpu_custom_call.1} parent=5 // pred_check
      %p200 = pneg %p199
    $region34: #{tpu_custom_call.1} parent=5 // pred_check_branch
      %202 = sbr.rel (%p200) target = $region36
    $region35: #{tpu_custom_call.1} parent=5 // pred_region
      // Predicated region
      $region37: #{tpu_custom_call.1} parent=35 // pred_check
        %p203 = pneg %p32
      $region38: #{tpu_custom_call.1} parent=35 // pred_check_branch
        %205 = sbr.rel (%p203) target = $region40
      $region39: #{tpu_custom_call.1} parent=35 // pred_region
        %s206 = smul.u32 4, %s12
        %p207 = scmp.lt.s32.totalorder %s206, 7
        %s208 = scalar_select %p207, %s206, 7
        %s209 = smul.addr %s208, 4
        %s210 = scalar_lea.vmem %s0, %s209
        %s211 = smul.u32 4, %s12
      $region40: #{tpu_custom_call.1} parent=35 // pred_fallthru
        _
    $region36: #{tpu_custom_call.1} parent=5 // pred_fallthru
      _
    %p212 = scmp.le.s32.totalorder 1, %s12
    %p213 = scmp.lt.s32.totalorder %s12, 3
    %p214 = pnand %p212, %p213
    %p215 = pneg %p214
    // Predicated region
    $region41: #{tpu_custom_call.1} parent=5 // pred_check
      _
    $region42: #{tpu_custom_call.1} parent=5 // pred_check_branch
      %217 = sbr.rel (%p214) target = $region44
    $region43: #{tpu_custom_call.1} parent=5 // pred_region
      %s218 = ssub.s32 %s12, 1
      %s219 = smul.u32 4, %s17
      %p220 = scmp.lt.s32.totalorder %s219, 7
      %s221 = scalar_select %p220, %s219, 7
      %s222 = smul.addr %s221, 4
      %s223 = scalar_lea.vmem %s0, %s222
      %p224 = pneg %p38
      %p225 = pneg %p35
      %p226 = pneg %p59
      %p227 = pneg %p56
      %p228 = pneg %p80
      %p229 = pneg %p77
      %p230 = pneg %p101
      %p231 = pneg %p98
      %p232 = pneg %p122
      %p233 = pneg %p119
      %p234 = pneg %p143
      %p235 = pneg %p140
      %p236 = pneg %p169
      %p237 = pneg %p166
      %s238 = smul.u32 4, %s17
      %p239 = scmp.lt.s32.totalorder %s238, 7
      %s240 = scalar_select %p239, %s238, 7
      %s241 = smul.addr %s240, 8
      %s242 = scalar_lea.vmem %s6, %s241
      %s243 = smul.u32 4, %s17
      %p244 = scmp.lt.s32.totalorder %s243, 7
      %s245 = scalar_select %p244, %s243, 7
      %s246 = smul.addr %s245, 4
      %s247 = scalar_lea.vmem %s0, %s246
      %s248 = smul.u32 4, %s17
      %s249 = smul.u32 4, %s17
      %p250 = scmp.lt.s32.totalorder %s249, 7
      %s251 = scalar_select %p250, %s249, 7
      %s252 = smul.addr %s251, 8
      %s253 = scalar_lea.vmem %s6, %s252
      %s254 = smul.u32 4, %s17
      %v256 = vld [vmem:[%s247] sm:$0xf]
      %v257 = vld [vmem:[%s247 + $0x4] sm:$0xf]
      %v258 = vld [vmem:[%s247 + $0x8] sm:$0xf]
      %v259 = vld [vmem:[%s247 + $0xc] sm:$0xf]
      %v260 = vld [vmem:[%s1] sm:$0xf]
      %v261 = vld [vmem:[%s1 + $0x4] sm:$0xf]
      %v262 = vld [vmem:[%s1 + $0x8] sm:$0xf]
      %v263 = vld [vmem:[%s1 + $0xc] sm:$0xf]
      %v264 = vld [vmem:[%s5] sm:$0x1]
      %v265 = vlaneseq
      %v266 = vshrl.u32 %v265, 7
      %v267 = vsub.s32 0, %v266
      %v268 = vrot.slane %v264, %v267
      %v273 = vunpack.c.l.b16 %v256
      %v274 = vunpack.c.l.b16 %v257
      %v275 = vunpack.c.l.b16 %v258
      %v276 = vunpack.c.l.b16 %v259
      %v277 = vpack.c.b16 %v274, %v273
      %v278 = vpack.c.b16 %v276, %v275
      %v283 = vunpack.c.l.b16 %v260
      %v284 = vunpack.c.l.b16 %v261
      %v285 = vunpack.c.l.b16 %v262
      %v286 = vunpack.c.l.b16 %v263
      %v287 = vpack.c.b16 %v284, %v283
      %v288 = vpack.c.b16 %v286, %v285
      %vm291 = vcmask 261120
      %v293 = vsel %vm291, %v277, 0
      %v296 = vsel %vm291, %v278, 0
      %298 = vmatprep.subr.bf16.mxu0 0
      %299 = vmatpush1.bf16.msra.mxu0 0
      %300 = vmatprep.subr.bf16.mxu0 0
      %301 = vmatpush1.bf16.msra.mxu0 0
      %302 = vmatprep.subr.bf16.mxu0 0
      %303 = vmatpush1.bf16.msra.mxu0 0
      %304 = vmatprep.subr.bf16.mxu0 0
      %305 = vmatpush1.bf16.msra.mxu0 0
      %306 = vmatprep.subr.bf16.mxu0 0
      %307 = vmatpush1.bf16.msra.mxu0 0
      %308 = vmatprep.subr.bf16.mxu0 0
      %309 = vmatpush1.bf16.msra.mxu0 0
      %310 = vmatprep.subr.bf16.mxu0 0
      %311 = vmatpush1.bf16.msra.mxu0 %v288
      %312 = vmatprep.subr.bf16.mxu0 0
      %313 = vmatpush1.bf16.msra.mxu0 %v287
      %314 = vmatprep.subr.bf16.mxu0 0
      %315 = vmatpush2.bf16.msra.mxu0 0
      %316 = vmatprep.subr.bf16.mxu0 0
      %317 = vmatpush2.bf16.msra.mxu0 0
      %318 = vmatprep.subr.bf16.mxu0 0
      %319 = vmatpush2.bf16.msra.mxu0 0
      %320 = vmatprep.subr.bf16.mxu0 0
      %321 = vmatpush2.bf16.msra.mxu0 0
      %322 = vmatprep.subr.bf16.mxu0 0
      %323 = vmatpush2.bf16.msra.mxu0 0
      %324 = vmatprep.subr.bf16.mxu0 0
      %325 = vmatpush2.bf16.msra.mxu0 0
      %326 = vmatprep.subr.bf16.mxu0 0
      %327 = vmatpush2.bf16.msra.mxu0 0
      %328 = vmatprep.subr.bf16.mxu0 0
      %329 = vmatpush2.bf16.msra.mxu0 0
      %330 = vmatprep.mubr.bf16.mxu0 0
      %331 = vmatmul.mubr.bf16.gmra.mxu0 %v293
      %v332 = vpop.f32.mrf.mxu0
      %v333 = vadd.f32 %v268, %v332
      %v334 = vpop.f32.mrf.mxu0
      %v335 = vpop.f32.mrf.mxu0
      %v336 = vadd.f32 %v268, %v335
      %v337 = vpop.f32.mrf.mxu0
      %338 = vmatprep.mubr.bf16.mxu0 0
      %339 = vmatmul.mubr.bf16.gmra.mxu0 %v296
      %v340 = vpop.f32.mrf.mxu0
      %v341 = vadd.f32 %v268, %v340
      %v342 = vpop.f32.mrf.mxu0
      %v343 = vpop.f32.mrf.mxu0
      %v344 = vadd.f32 %v268, %v343
      %v345 = vpop.f32.mrf.mxu0
      %346 = vdwg.mxu0
      %v347 = vmax.f32 %v333, 0.0
      %v348 = vmax.f32 %v336, 0.0
      %v349 = vmax.f32 %v341, 0.0
      %v350 = vmax.f32 %v344, 0.0
      %v351 = vpack.c.bf16 %v348, %v347
      %v352 = vpack.c.bf16 %v350, %v349
      %v353 = vld [vmem:[%s2] sm:$0xf]
      %v354 = vld [vmem:[%s2 + $0x4] sm:$0xf]
      %v355 = vld [vmem:[%s2 + $0x8] sm:$0xf]
      %v356 = vld [vmem:[%s2 + $0xc] sm:$0xf]
      %v357 = vld [vmem:[%s2 + $0x10] sm:$0xf]
      %v358 = vld [vmem:[%s2 + $0x14] sm:$0xf]
      %v359 = vld [vmem:[%s2 + $0x18] sm:$0xf]
      %v360 = vld [vmem:[%s2 + $0x1c] sm:$0xf]
      %v361 = vld [vmem:[%s5 + $0x1] sm:$0x1]
      %v362 = vlaneseq
      %v363 = vshrl.u32 %v362, 7
      %v364 = vsub.s32 0, %v363
      %v365 = vrot.slane %v361, %v364
      %v374 = vunpack.c.l.b16 %v353
      %v375 = vunpack.c.l.b16 %v354
      %v376 = vunpack.c.l.b16 %v355
      %v377 = vunpack.c.l.b16 %v356
      %v378 = vunpack.c.l.b16 %v357
      %v379 = vunpack.c.l.b16 %v358
      %v380 = vunpack.c.l.b16 %v359
      %v381 = vunpack.c.l.b16 %v360
      %v382 = vpack.c.b16 %v375, %v374
      %v383 = vpack.c.b16 %v377, %v376
      %v384 = vpack.c.b16 %v379, %v378
      %v385 = vpack.c.b16 %v381, %v380
      %vm390 = vcmask 523264
      %v392 = vsel %vm390, %v351, 0
      %v395 = vsel %vm390, %v352, 0
      %397 = vmatprep.subr.bf16.mxu0 0
      %398 = vmatpush1.bf16.msra.mxu0 0
      %399 = vmatprep.subr.bf16.mxu0 0
      %400 = vmatpush1.bf16.msra.mxu0 0
      %401 = vmatprep.subr.bf16.mxu0 0
      %402 = vmatpush1.bf16.msra.mxu0 0
      %403 = vmatprep.subr.bf16.mxu0 0
      %404 = vmatpush1.bf16.msra.mxu0 0
      %405 = vmatprep.subr.bf16.mxu0 0
      %406 = vmatpush1.bf16.msra.mxu0 %v385
      %407 = vmatprep.subr.bf16.mxu0 0
      %408 = vmatpush1.bf16.msra.mxu0 %v384
      %409 = vmatprep.subr.bf16.mxu0 0
      %410 = vmatpush1.bf16.msra.mxu0 %v383
      %411 = vmatprep.subr.bf16.mxu0 0
      %412 = vmatpush1.bf16.msra.mxu0 %v382
      %413 = vmatprep.subr.bf16.mxu0 0
      %414 = vmatpush2.bf16.msra.mxu0 0
      %415 = vmatprep.subr.bf16.mxu0 0
      %416 = vmatpush2.bf16.msra.mxu0 0
      %417 = vmatprep.subr.bf16.mxu0 0
      %418 = vmatpush2.bf16.msra.mxu0 0
      %419 = vmatprep.subr.bf16.mxu0 0
      %420 = vmatpush2.bf16.msra.mxu0 0
      %421 = vmatprep.subr.bf16.mxu0 0
      %422 = vmatpush2.bf16.msra.mxu0 0
      %423 = vmatprep.subr.bf16.mxu0 0
      %424 = vmatpush2.bf16.msra.mxu0 0
      %425 = vmatprep.subr.bf16.mxu0 0
      %426 = vmatpush2.bf16.msra.mxu0 0
      %427 = vmatprep.subr.bf16.mxu0 0
      %428 = vmatpush2.bf16.msra.mxu0 0
      %429 = vmatprep.mubr.bf16.mxu0 0
      %430 = vmatmul.mubr.bf16.gmra.mxu0 %v392
      %v431 = vpop.f32.mrf.mxu0
      %v432 = vadd.f32 %v365, %v431
      %v433 = vpop.f32.mrf.mxu0
      %v434 = vpop.f32.mrf.mxu0
      %v435 = vadd.f32 %v365, %v434
      %v436 = vpop.f32.mrf.mxu0
      %437 = vmatprep.mubr.bf16.mxu0 0
      %438 = vmatmul.mubr.bf16.gmra.mxu0 %v395
      %v439 = vpop.f32.mrf.mxu0
      %v440 = vadd.f32 %v365, %v439
      %v441 = vpop.f32.mrf.mxu0
      %v442 = vpop.f32.mrf.mxu0
      %v443 = vadd.f32 %v365, %v442
      %v444 = vpop.f32.mrf.mxu0
      %445 = vdwg.mxu0
      %v446 = vmax.f32 %v432, 0.0
      %v447 = vmax.f32 %v435, 0.0
      %v448 = vmax.f32 %v440, 0.0
      %v449 = vmax.f32 %v443, 0.0
      %v450 = vpack.c.bf16 %v447, %v446
      %v451 = vpack.c.bf16 %v449, %v448
      %v452 = vld [vmem:[%s3] sm:$0xf]
      %v453 = vld [vmem:[%s3 + $0x4] sm:$0xf]
      %v454 = vld [vmem:[%s3 + $0x8] sm:$0xf]
      %v455 = vld [vmem:[%s3 + $0xc] sm:$0xf]
      %v456 = vld [vmem:[%s3 + $0x10] sm:$0xf]
      %v457 = vld [vmem:[%s3 + $0x14] sm:$0xf]
      %v458 = vld [vmem:[%s3 + $0x18] sm:$0xf]
      %v459 = vld [vmem:[%s3 + $0x1c] sm:$0xf]
      %v460 = vld [vmem:[%s5 + $0x2] sm:$0x1]
      %v461 = vlaneseq
      %v462 = vshrl.u32 %v461, 7
      %v463 = vsub.s32 0, %v462
      %v464 = vrot.slane %v460, %v463
      %v473 = vunpack.c.l.b16 %v452
      %v474 = vunpack.c.l.b16 %v453
      %v475 = vunpack.c.l.b16 %v454
      %v476 = vunpack.c.l.b16 %v455
      %v477 = vunpack.c.l.b16 %v456
      %v478 = vunpack.c.l.b16 %v457
      %v479 = vunpack.c.l.b16 %v458
      %v480 = vunpack.c.l.b16 %v459
      %v481 = vpack.c.b16 %v474, %v473
      %v482 = vpack.c.b16 %v476, %v475
      %v483 = vpack.c.b16 %v478, %v477
      %v484 = vpack.c.b16 %v480, %v479
      %v490 = vsel %vm390, %v450, 0
      %v493 = vsel %vm390, %v451, 0
      %495 = vmatprep.subr.bf16.mxu0 0
      %496 = vmatpush1.bf16.msra.mxu0 0
      %497 = vmatprep.subr.bf16.mxu0 0
      %498 = vmatpush1.bf16.msra.mxu0 0
      %499 = vmatprep.subr.bf16.mxu0 0
      %500 = vmatpush1.bf16.msra.mxu0 0
      %501 = vmatprep.subr.bf16.mxu0 0
      %502 = vmatpush1.bf16.msra.mxu0 0
      %503 = vmatprep.subr.bf16.mxu0 0
      %504 = vmatpush1.bf16.msra.mxu0 %v484
      %505 = vmatprep.subr.bf16.mxu0 0
      %506 = vmatpush1.bf16.msra.mxu0 %v483
      %507 = vmatprep.subr.bf16.mxu0 0
      %508 = vmatpush1.bf16.msra.mxu0 %v482
      %509 = vmatprep.subr.bf16.mxu0 0
      %510 = vmatpush1.bf16.msra.mxu0 %v481
      %511 = vmatprep.subr.bf16.mxu0 0
      %512 = vmatpush2.bf16.msra.mxu0 0
      %513 = vmatprep.subr.bf16.mxu0 0
      %514 = vmatpush2.bf16.msra.mxu0 0
      %515 = vmatprep.subr.bf16.mxu0 0
      %516 = vmatpush2.bf16.msra.mxu0 0
      %517 = vmatprep.subr.bf16.mxu0 0
      %518 = vmatpush2.bf16.msra.mxu0 0
      %519 = vmatprep.subr.bf16.mxu0 0
      %520 = vmatpush2.bf16.msra.mxu0 0
      %521 = vmatprep.subr.bf16.mxu0 0
      %522 = vmatpush2.bf16.msra.mxu0 0
      %523 = vmatprep.subr.bf16.mxu0 0
      %524 = vmatpush2.bf16.msra.mxu0 0
      %525 = vmatprep.subr.bf16.mxu0 0
      %526 = vmatpush2.bf16.msra.mxu0 0
      %527 = vmatprep.mubr.bf16.mxu0 0
      %528 = vmatmul.mubr.bf16.gmra.mxu0 %v490
      %v529 = vpop.f32.mrf.mxu0
      %v530 = vadd.f32 %v464, %v529
      %v531 = vpop.f32.mrf.mxu0
      %v532 = vpop.f32.mrf.mxu0
      %v533 = vadd.f32 %v464, %v532
      %v534 = vpop.f32.mrf.mxu0
      %535 = vmatprep.mubr.bf16.mxu0 0
      %536 = vmatmul.mubr.bf16.gmra.mxu0 %v493
      %v537 = vpop.f32.mrf.mxu0
      %v538 = vadd.f32 %v464, %v537
      %v539 = vpop.f32.mrf.mxu0
      %v540 = vpop.f32.mrf.mxu0
      %v541 = vadd.f32 %v464, %v540
      %v542 = vpop.f32.mrf.mxu0
      %543 = vdwg.mxu0
      %v544 = vmax.f32 %v530, 0.0
      %v545 = vmax.f32 %v533, 0.0
      %v546 = vmax.f32 %v538, 0.0
      %v547 = vmax.f32 %v541, 0.0
      %v548 = vpack.c.bf16 %v545, %v544
      %v549 = vpack.c.bf16 %v547, %v546
      %v550 = vld [vmem:[%s4] sm:$0xf]
      %v551 = vld [vmem:[%s4 + $0x4] sm:$0xf]
      %v552 = vld [vmem:[%s4 + $0x8] sm:$0xf]
      %v553 = vld [vmem:[%s4 + $0xc] sm:$0xf]
      %v554 = vld [vmem:[%s4 + $0x10] sm:$0xf]
      %v555 = vld [vmem:[%s4 + $0x14] sm:$0xf]
      %v556 = vld [vmem:[%s4 + $0x18] sm:$0xf]
      %v557 = vld [vmem:[%s4 + $0x1c] sm:$0xf]
      %v558 = vld [vmem:[%s5 + $0x3] sm:$0x1]
      %v559 = vlaneseq
      %v560 = vshrl.u32 %v559, 7
      %v561 = vsub.s32 0, %v560
      %v562 = vrot.slane %v558, %v561
      %v571 = vunpack.c.l.b16 %v550
      %v572 = vunpack.c.l.b16 %v551
      %v573 = vunpack.c.l.b16 %v552
      %v574 = vunpack.c.l.b16 %v553
      %v575 = vunpack.c.l.b16 %v554
      %v576 = vunpack.c.l.b16 %v555
      %v577 = vunpack.c.l.b16 %v556
      %v578 = vunpack.c.l.b16 %v557
      %v579 = vpack.c.b16 %v572, %v571
      %v580 = vpack.c.b16 %v574, %v573
      %v581 = vpack.c.b16 %v576, %v575
      %v582 = vpack.c.b16 %v578, %v577
      %v588 = vsel %vm390, %v548, 0
      %v591 = vsel %vm390, %v549, 0
      %593 = vmatprep.subr.bf16.mxu0 0
      %594 = vmatpush1.bf16.msra.mxu0 0
      %595 = vmatprep.subr.bf16.mxu0 0
      %596 = vmatpush1.bf16.msra.mxu0 0
      %597 = vmatprep.subr.bf16.mxu0 0
      %598 = vmatpush1.bf16.msra.mxu0 0
      %599 = vmatprep.subr.bf16.mxu0 0
      %600 = vmatpush1.bf16.msra.mxu0 0
      %601 = vmatprep.subr.bf16.mxu0 0
      %602 = vmatpush1.bf16.msra.mxu0 %v582
      %603 = vmatprep.subr.bf16.mxu0 0
      %604 = vmatpush1.bf16.msra.mxu0 %v581
      %605 = vmatprep.subr.bf16.mxu0 0
      %606 = vmatpush1.bf16.msra.mxu0 %v580
      %607 = vmatprep.subr.bf16.mxu0 0
      %608 = vmatpush1.bf16.msra.mxu0 %v579
      %609 = vmatprep.subr.bf16.mxu0 0
      %610 = vmatpush2.bf16.msra.mxu0 0
      %611 = vmatprep.subr.bf16.mxu0 0
      %612 = vmatpush2.bf16.msra.mxu0 0
      %613 = vmatprep.subr.bf16.mxu0 0
      %614 = vmatpush2.bf16.msra.mxu0 0
      %615 = vmatprep.subr.bf16.mxu0 0
      %616 = vmatpush2.bf16.msra.mxu0 0
      %617 = vmatprep.subr.bf16.mxu0 0
      %618 = vmatpush2.bf16.msra.mxu0 0
      %619 = vmatprep.subr.bf16.mxu0 0
      %620 = vmatpush2.bf16.msra.mxu0 0
      %621 = vmatprep.subr.bf16.mxu0 0
      %622 = vmatpush2.bf16.msra.mxu0 0
      %623 = vmatprep.subr.bf16.mxu0 0
      %624 = vmatpush2.bf16.msra.mxu0 0
      %625 = vmatprep.mubr.bf16.mxu0 0
      %626 = vmatmul.mubr.bf16.gmra.mxu0 %v588
      %v627 = vpop.f32.mrf.mxu0
      %v628 = vadd.f32 %v562, %v627
      %v629 = vpop.f32.mrf.mxu0
      %v630 = vpop.f32.mrf.mxu0
      %v631 = vadd.f32 %v562, %v630
      %v632 = vpop.f32.mrf.mxu0
      %633 = vmatprep.mubr.bf16.mxu0 0
      %634 = vmatmul.mubr.bf16.gmra.mxu0 %v591
      %v635 = vpop.f32.mrf.mxu0
      %v636 = vadd.f32 %v562, %v635
      %v637 = vpop.f32.mrf.mxu0
      %v638 = vpop.f32.mrf.mxu0
      %v639 = vadd.f32 %v562, %v638
      %v640 = vpop.f32.mrf.mxu0
      %641 = vdwg.mxu0
      %v642 = vmax.f32 %v628, 0.0
      %v643 = vmax.f32 %v631, 0.0
      %v644 = vmax.f32 %v636, 0.0
      %v645 = vmax.f32 %v639, 0.0
      %vm646 = vcmask 130048
      %647 = vst.msk [vmem:[%s253] sm:$0xff] %vm646, %v642
      %648 = vst.msk [vmem:[%s253 + $0x8] sm:$0xff] %vm646, %v643
      %649 = vst.msk [vmem:[%s253 + $0x10] sm:$0xff] %vm646, %v644
      %650 = vst.msk [vmem:[%s253 + $0x18] sm:$0xff] %vm646, %v645
      %s651 = smul.u32 4, %s17
      %p652 = scmp.lt.s32.totalorder %s651, 7
      %s653 = scalar_select %p652, %s651, 7
      %s654 = smul.addr %s653, 8
      %s655 = scalar_lea.vmem %s6, %s654
      // Predicated region
      $region45: #{tpu_custom_call.1} parent=43 // pred_check
        %p656 = pneg %p166
      $region46: #{tpu_custom_call.1} parent=43 // pred_check_branch
        %658 = sbr.rel (%p656) target = $region48
      $region47: #{tpu_custom_call.1} parent=43 // pred_region
        %s659 = smul.u32 4, %s17
      $region48: #{tpu_custom_call.1} parent=43 // pred_fallthru
        _
    $region44: #{tpu_custom_call.1} parent=5 // pred_fallthru
      _
    %p660 = scmp.le.s32.totalorder 2, %s12
    // Predicated region
    $region49: #{tpu_custom_call.1} parent=5 // pred_check
      %p661 = pneg %p660
    $region50: #{tpu_custom_call.1} parent=5 // pred_check_branch
      %663 = sbr.rel (%p661) target = $region52
    $region51: #{tpu_custom_call.1} parent=5 // pred_region
      %s664 = ssub.s32 %s12, 2
      // Predicated region
      $region53: #{tpu_custom_call.1} parent=51 // pred_check
        %p665 = pneg %p172
      $region54: #{tpu_custom_call.1} parent=51 // pred_check_branch
        %667 = sbr.rel (%p665) target = $region56
      $region55: #{tpu_custom_call.1} parent=51 // pred_region
        %s668 = smul.u32 4, %s18
        %p669 = scmp.lt.s32.totalorder %s668, 7
        %s670 = scalar_select %p669, %s668, 7
        %s671 = smul.addr %s670, 8
        %s672 = scalar_lea.vmem %s6, %s671
      $region56: #{tpu_custom_call.1} parent=51 // pred_fallthru
        _
    $region52: #{tpu_custom_call.1} parent=5 // pred_fallthru
      _
  $region6: #{tpu_custom_call.1} parent=0 // loop_footer
    %s16 = sadd.s32 1, %s12
  $region7: #{tpu_custom_call.1} parent=0 // loop_footer_branch
    %11 = sbr.rel target = $region3
  $region8: #{tpu_custom_call.1} parent=0 // loop_exit
    _

</llo_original>
